<compile_context>
chip_gen: v7x
topology: tpu7x:2x2x1
jax: 0.10.0
libtpu: 0.0.40
codegen_flags: <defaults>
</compile_context>

<pallas_src>
import jax
import jax.numpy as jnp
from jax.experimental import pallas as pl
from jax.experimental.pallas import tpu as pltpu

_LANE = 128
_SUBLANE = 8
_MIB = 1024 * 1024
# Approximate bytes of live f32 temporaries per block element inside the
# kernel (exp/weighted product, cast-for-store, slack) for the VMEM model.
_F32_TEMP_BYTES = 16


def _softmax_kernel(x_ref, o_ref):
    # x_ref / o_ref: (1, Hb, TL, S)
    x = x_ref[...]
    m = jnp.max(x, axis=-1, keepdims=True)
    e = jnp.exp((x - m).astype(jnp.float32))
    inv = pl.reciprocal(jnp.sum(e, axis=-1, keepdims=True), approx=True)
    o_ref[...] = (e * inv).astype(o_ref.dtype)


def _weighted_softmax_kernel(x_ref, w_ref, o_ref):
    # x_ref / o_ref: (1, Hb, TL, S); w_ref: (1, TL, S), broadcast over heads.
    # Fused: softmax -> reweight -> renormalize == (exp(x-m)*w) / sum(exp(x-m)*w, -1)
    x = x_ref[...]
    m = jnp.max(x, axis=-1, keepdims=True)
    w = w_ref[...].astype(jnp.float32)[:, None, :, :]        # unsqueeze(1)
    ew = jnp.exp((x - m).astype(jnp.float32)) * w             # single big temp
    inv = pl.reciprocal(jnp.sum(ew, axis=-1, keepdims=True), approx=True)
    o_ref[...] = (ew * inv).astype(o_ref.dtype)


def _round_up(v, m):
    return (v + m - 1) // m * m


def _device_budget():
    """Return (x-block byte budget in native dtype, vmem_limit_bytes)."""
    try:
        kind = jax.devices()[0].device_kind.lower()
    except Exception:
        kind = ""
    if "v7" in kind:
        return 4 * _MIB, 48 * _MIB        # 64 MiB physical VMEM per TC
    if "v6" in kind:
        return 4 * _MIB, 64 * _MIB        # 128 MiB physical VMEM
    if "v5" in kind:
        return 2 * _MIB, 32 * _MIB        # 2 MiB step already <10% overhead
    return 2 * _MIB, 32 * _MIB            # conservative fallback


def _choose_tl(L, block_row_bytes, total_row_bytes, tile_bytes, vmem_budget, min_l_tiles):
    tl = min(tile_bytes // max(block_row_bytes, 1),
             vmem_budget // max(total_row_bytes, 1))
    tl = max(_SUBLANE, (tl // _SUBLANE) * _SUBLANE)
    if min_l_tiles > 1 and L > _SUBLANE:
        tl = min(tl, _round_up(pl.cdiv(L, min_l_tiles), _SUBLANE))
    return L if tl >= L else tl


def weighted_softmax(x, dim=-1, weight=None):
    """Pallas TPU implementation of WeightedSoftMax.forward (softmax over last axis).

    x:      (B, H, L, S)
    weight: (B, L, S) or None
    """
    assert x.ndim == 4
    B, H, L, S = x.shape
    assert dim in (-1, x.ndim - 1), "kernel implements softmax over the last axis"
    # TODO(synk): general (non-last) `dim` would need a transpose wrapper; the
    # Cluster-ViT call site always uses dim=-1.

    itemsize = jnp.dtype(x.dtype).itemsize
    tile_bytes, vmem_limit = _device_budget()
    # Headroom for the double-buffered weight tile + Mosaic internal scratch.
    vmem_budget = max(vmem_limit - 12 * _MIB, vmem_limit // 2)

    # Bytes per L-row of one head: the x block itself (native dtype) and the
    # full VMEM footprint (x + out, both double-buffered, plus f32 temporaries).
    row_block = S * itemsize
    row_total = S * (4 * itemsize + _F32_TEMP_BYTES)

    fold_h = (H * _SUBLANE * row_block <= tile_bytes
              and H * _SUBLANE * row_total <= vmem_budget)

    out_shape = jax.ShapeDtypeStruct((B, H, L, S), x.dtype)

    elems = B * H * L * S
    bytes_accessed = 2 * elems * itemsize
    if weight is not None:
        bytes_accessed += int(weight.size) * jnp.dtype(weight.dtype).itemsize
    cost = pl.CostEstimate(flops=5 * elems, transcendentals=elems,
                           bytes_accessed=bytes_accessed)

    if fold_h:
        # One grid step covers all heads of an L-tile: the weight tile is DMA'd
        # exactly once per (batch, l-tile) and broadcast over heads in-kernel.
        min_l_tiles = 1 if B >= 2 else 2          # keep both v7x TCs busy
        TL = _choose_tl(L, H * row_block, H * row_total, tile_bytes, vmem_budget, min_l_tiles)
        grid = (B, pl.cdiv(L, TL))
        x_spec = pl.BlockSpec((1, H, TL, S), lambda b, lt: (b, 0, lt, 0))
        o_spec = pl.BlockSpec((1, H, TL, S), lambda b, lt: (b, 0, lt, 0))
        w_spec = pl.BlockSpec((1, TL, S), lambda b, lt: (b, lt, 0))
        semantics = ("parallel", "parallel")
    else:
        # Head axis innermost. With a weight we use a head-independent weight
        # index_map so the tile stays VMEM-resident across all H steps (axis is
        # "arbitrary"); with weight=None the head axis is freely shardable.
        other_par = B * (H if weight is None else 1)
        min_l_tiles = 1 if other_par >= 2 else 2
        TL = _choose_tl(L, row_block, row_total, tile_bytes, vmem_budget, min_l_tiles)
        grid = (B, pl.cdiv(L, TL), H)
        x_spec = pl.BlockSpec((1, 1, TL, S), lambda b, lt, h: (b, h, lt, 0))
        o_spec = pl.BlockSpec((1, 1, TL, S), lambda b, lt, h: (b, h, lt, 0))
        w_spec = pl.BlockSpec((1, TL, S), lambda b, lt, h: (b, lt, 0))
        semantics = ("parallel", "parallel",
                     "parallel" if weight is None else "arbitrary")

    cparams = pltpu.CompilerParams(
        dimension_semantics=semantics,
        vmem_limit_bytes=vmem_limit,
    )

    if weight is None:
        return pl.pallas_call(
            _softmax_kernel,
            out_shape=out_shape,
            grid=grid,
            in_specs=[x_spec],
            out_specs=o_spec,
            compiler_params=cparams,
            cost_estimate=cost,
        )(x)

    assert weight.shape == (B, L, S)
    return pl.pallas_call(
        _weighted_softmax_kernel,
        out_shape=out_shape,
        grid=grid,
        in_specs=[x_spec, w_spec],
        out_specs=o_spec,
        compiler_params=cparams,
        cost_estimate=cost,
    )(x, weight)


def _reference(x, dim=-1, weight=None):
    ret = jax.nn.softmax(x.astype(jnp.float32), axis=dim)
    if weight is not None:
        ret = ret * weight.astype(jnp.float32)[:, None, :, :]
        ret = ret / jnp.sum(ret, axis=-1, keepdims=True)
    return ret.astype(x.dtype)


if __name__ == "__main__":
    key = jax.random.PRNGKey(0)
    kx, kw, kx2, kw2 = jax.random.split(key, 4)

    # Primary shape.
    B, H, L, S = 2, 4, 16, 16
    x = jax.random.normal(kx, (B, H, L, S), dtype=jnp.float32)
    # Positive weights (as produced by the clustering counts in Cluster-ViT).
    weight = jax.random.uniform(kw, (B, L, S), dtype=jnp.float32, minval=0.1, maxval=1.0)

    # Weighted path.
    out_w = jax.block_until_ready(weighted_softmax(x, dim=-1, weight=weight))
    ref_w = _reference(x, dim=-1, weight=weight)
    assert out_w.shape == ref_w.shape
    assert jnp.allclose(out_w, ref_w, atol=2e-3, rtol=2e-3), "weighted path mismatch"

    # Plain softmax path (weight=None).
    out_p = jax.block_until_ready(weighted_softmax(x, dim=-1, weight=None))
    ref_p = _reference(x, dim=-1, weight=None)
    assert out_p.shape == ref_p.shape
    assert jnp.allclose(out_p, ref_p, atol=2e-3, rtol=2e-3), "plain path mismatch"

    # Ragged shape: B=1 (forces >=2 L tiles for TC parallelism), L not a
    # multiple of the L tile, S not a multiple of 128 (masked final lane group).
    B2, H2, L2, S2 = 1, 2, 12, 20
    x2 = jax.random.normal(kx2, (B2, H2, L2, S2), dtype=jnp.float32)
    w2 = jax.random.uniform(kw2, (B2, L2, S2), dtype=jnp.float32, minval=0.1, maxval=1.0)
    out2 = jax.block_until_ready(weighted_softmax(x2, dim=-1, weight=w2))
    ref2 = _reference(x2, dim=-1, weight=w2)
    assert out2.shape == ref2.shape
    assert jnp.allclose(out2, ref2, atol=2e-3, rtol=2e-3), "ragged weighted path mismatch"

    print("KERNEL_OK")
</pallas_src>

<mosaic_0001>
module attributes {stable_mosaic.version = 11 : i64} {
  func.func @_weighted_softmax_kernel(%arg0: i32, %arg1: i32, %arg2: memref<1x4x16x16xf32, #tpu.memory_space<vmem>>, %arg3: memref<1x16x16xf32, #tpu.memory_space<vmem>>, %arg4: memref<1x4x16x16xf32, #tpu.memory_space<vmem>>) attributes {dimension_semantics = [#tpu.dimension_semantics<parallel>, #tpu.dimension_semantics<parallel>], iteration_bounds = array<i64: 2, 1>, scalar_prefetch = 0 : i64, scratch_operands = 0 : i64, tpu.core_type = #tpu.core_type<tc>, window_params = [{transform_indices = @transform_0, window_bounds = array<i64: 1, 4, 16, 16>}, {transform_indices = @transform_1, window_bounds = array<i64: 1, 16, 16>}, {transform_indices = @transform_2, window_bounds = array<i64: 1, 4, 16, 16>}]} {
    %c0 = arith.constant 0 : index
    %c0_0 = arith.constant 0 : index
    %c0_1 = arith.constant 0 : index
    %c0_2 = arith.constant 0 : index
    %0 = vector.load %arg2[%c0, %c0_0, %c0_1, %c0_2] : memref<1x4x16x16xf32, #tpu.memory_space<vmem>>, vector<1x4x16x16xf32>
    %cst = arith.constant dense<0xFF800000> : vector<1x4x16xf32>
    %1 = vector.multi_reduction <maximumf>, %0, %cst [3] : vector<1x4x16x16xf32> to vector<1x4x16xf32>
    %2 = vector.shape_cast %1 : vector<1x4x16xf32> to vector<1x4x16x1xf32>
    %c0_3 = arith.constant 0 : index
    %c0_4 = arith.constant 0 : index
    %c0_5 = arith.constant 0 : index
    %3 = vector.load %arg3[%c0_3, %c0_4, %c0_5] : memref<1x16x16xf32, #tpu.memory_space<vmem>>, vector<1x16x16xf32>
    %4 = vector.shape_cast %3 : vector<1x16x16xf32> to vector<1x1x16x16xf32>
    %5 = vector.broadcast %2 : vector<1x4x16x1xf32> to vector<1x4x16x16xf32>
    %6 = arith.subf %0, %5 : vector<1x4x16x16xf32>
    %7 = math.exp %6 : vector<1x4x16x16xf32>
    %8 = vector.broadcast %4 : vector<1x1x16x16xf32> to vector<1x4x16x16xf32>
    %9 = arith.mulf %7, %8 : vector<1x4x16x16xf32>
    %cst_6 = arith.constant dense<0.000000e+00> : vector<1x4x16xf32>
    %10 = vector.multi_reduction <add>, %9, %cst_6 [3] : vector<1x4x16x16xf32> to vector<1x4x16xf32>
    %11 = vector.shape_cast %10 : vector<1x4x16xf32> to vector<1x4x16x1xf32>
    %12 = tpu.reciprocal %11 {approx = true} : vector<1x4x16x1xf32> -> vector<1x4x16x1xf32>
    %13 = vector.broadcast %12 : vector<1x4x16x1xf32> to vector<1x4x16x16xf32>
    %14 = arith.mulf %9, %13 : vector<1x4x16x16xf32>
    %c0_7 = arith.constant 0 : index
    %c0_8 = arith.constant 0 : index
    %c0_9 = arith.constant 0 : index
    %c0_10 = arith.constant 0 : index
    %15 = vector.load %arg4[%c0_7, %c0_8, %c0_9, %c0_10] : memref<1x4x16x16xf32, #tpu.memory_space<vmem>>, vector<1x4x16x16xf32>
    tpu.vector_store %arg4[%c0_7, %c0_8, %c0_9, %c0_10], %14 {strides = array<i32>} : memref<1x4x16x16xf32, #tpu.memory_space<vmem>>, vector<1x4x16x16xf32>,
    return
  }
  func.func @transform_0(%arg0: i32, %arg1: i32) -> (i32, i32, i32, i32) {
    %c0_i32 = arith.constant 0 : i32
    %c0_i32_0 = arith.constant 0 : i32
    %c0_i32_1 = arith.constant 0 : i32
    return %arg0, %c0_i32, %arg1, %c0_i32_0 : i32, i32, i32, i32
  }
  func.func @transform_1(%arg0: i32, %arg1: i32) -> (i32, i32, i32) {
    %c0_i32 = arith.constant 0 : i32
    %c0_i32_0 = arith.constant 0 : i32
    return %arg0, %arg1, %c0_i32 : i32, i32, i32
  }
  func.func @transform_2(%arg0: i32, %arg1: i32) -> (i32, i32, i32, i32) {
    %c0_i32 = arith.constant 0 : i32
    %c0_i32_0 = arith.constant 0 : i32
    %c0_i32_1 = arith.constant 0 : i32
    return %arg0, %c0_i32, %arg1, %c0_i32_0 : i32, i32, i32, i32
  }
}

</mosaic_0001>

<llo_original>
// kernel: tpu_custom_call.1
$region0: #{tpu_custom_call.1}
  #allocation0 [shape = 'u32[]', space=smem, size = 0x4, offset = 0x4, fixed_abs, tag = 'smem constant byte address 0x4 - core index']
  #allocation1 [shape = 'u32[144,128]{1,0:T(1,128)}', space=vmem, size = 0x12000, scoped, tag = 'internal scratch']
  %s0 = inlined_call_operand.hbm [shape: f32[2,4,16,16], index: 0, kind: input, shape index: {}]
  %s1 = inlined_call_operand.hbm [shape: f32[2,16,16], index: 1, kind: input, shape index: {}]
  %s2 = inlined_call_operand.hbm [shape: f32[2,4,16,16], index: 2, kind: output, shape index: {}]
  %s3 = sld [smem:[#allocation0]]
  $region49: #{tpu_custom_call.1} parent=0
    _
  %s5 = ssub.s32 1, %s3
  %s6 = scalar_select 0, %s5, %s3
  $region1: #{tpu_custom_call.1} parent=0
    #allocation2 [shape = 'u8[65536]{0}', space=vmem, size = 0x10000, scoped, tag = 'input window, operand 0']
    #allocation3 [shape = 's32[2]{0}', space=sflag, size = 0x8, scoped, tag = 'scoped memory for tpu_custom_call.1']
    #allocation4 [shape = 's32[2]{0}', space=sflag, size = 0x8, scoped, tag = 'scoped memory for tpu_custom_call.1']
    #allocation5 [shape = 'u8[16384]{0}', space=vmem, size = 0x4000, scoped, tag = 'input window, operand 1']
    #allocation6 [shape = 's32[2]{0}', space=sflag, size = 0x8, scoped, tag = 'scoped memory for tpu_custom_call.1']
    #allocation7 [shape = 'u8[65536]{0}', space=vmem, size = 0x10000, scoped, tag = 'output window, operand 0']
    %7 = vsyncpa [#allocation3], 0
    %s8 = scalar_lea.sflag [#allocation3], 1
    %9 = vsyncpa %s8, 0
    %10 = vsyncpa [#allocation6], 0
    %s11 = scalar_lea.sflag [#allocation6], 1
    %12 = vsyncpa %s11, 0
    %13 = vsyncpa [#allocation4], 0
    %s14 = scalar_lea.sflag [#allocation4], 1
    %15 = vsyncpa %s14, 0
    loop: start=0, step=1, limit=4
    $region2: #{tpu_custom_call.1} parent=1 // loop_pre_header
      _
    $region3: #{tpu_custom_call.1} parent=1 // loop_header
      %s17 = sphi 0, %s21
      %p18 = scmp.ge.s32.totalorder %s17, 4
      %s24 = sphi 0, %s36
      %s25 = sphi 0, %s32
      %s26 = sphi 0, %s24
      %s27 = sphi 0, %s25
      %s28 = sphi 0, %s26
      %s29 = sphi 0, %s27
      %s41 = sphi 0, %s43
      %s44 = sphi 0, %s41
      %s45 = sphi 0, %s44
      %s61 = sphi 0, %s45
      %s69 = sphi 0, %s71
      %s72 = sphi 0, %s69
      %s73 = sphi 0, %s72
      %s89 = sphi 0, %s73
      %s97 = sphi 0, %s99
      %s100 = sphi 0, %s97
      %s101 = sphi 0, %s100
      %s117 = sphi 0, %s101
    $region4: #{tpu_custom_call.1} parent=1 // loop_header_branch
      %20 = sbr.rel (%p18) target = $region8
    $region5: #{tpu_custom_call.1} parent=1 // loop_body
      %s22 = ssub.s32 %s17, 1
      %s23 = ssub.s32 %s17, 2
      %s30 = sadd.s32 1, %s25
      %p31 = scmp.ge.s32.totalorder %s30, 1
      %s32 = scalar_select %p31, 0, %s30
      %s33 = sadd.s32 1, %s24
      %s34 = scalar_select %p31, %s33, %s24
      %p35 = scmp.ge.s32.totalorder %s34, 2
      %s36 = scalar_select %p35, 0, %s34
      %s37 = ssub.s32 %s24, %s36
      %s38 = ssub.s32 %s25, %s32
      %s39 = sor.u32 %s37, %s38
      %p40 = scmp.eq.s32.totalorder %s39, 0
      %s42 = sadd.s32 %s41, 1
      %s43 = scalar_select %p40, %s41, %s42
      %p46 = pneg %p40
      %p47 = scmp.eq.s32.totalorder %s17, 1
      %p48 = por %p46, %p47
      %p49 = scmp.ne.s32.totalorder %s41, %s44
      %p50 = scmp.eq.s32.totalorder %s17, 0
      %p51 = por %p49, %p50
      %p52 = scmp.ne.s32.totalorder %s41, %s44
      %p53 = scmp.eq.s32.totalorder %s22, 1
      %p54 = por %p52, %p53
      %p55 = scmp.ne.s32.totalorder %s44, %s45
      %p56 = scmp.eq.s32.totalorder %s22, 0
      %p57 = por %p55, %p56
      %p58 = scmp.ne.s32.totalorder %s44, %s45
      %p59 = scmp.eq.s32.totalorder %s23, 1
      %p60 = por %p58, %p59
      %p62 = scmp.ne.s32.totalorder %s45, %s61
      %p63 = scmp.eq.s32.totalorder %s23, 0
      %p64 = por %p62, %p63
      %s65 = ssub.s32 %s24, %s36
      %s66 = ssub.s32 %s25, %s32
      %s67 = sor.u32 %s65, %s66
      %p68 = scmp.eq.s32.totalorder %s67, 0
      %s70 = sadd.s32 %s69, 1
      %s71 = scalar_select %p68, %s69, %s70
      %p74 = pneg %p68
      %p75 = scmp.eq.s32.totalorder %s17, 1
      %p76 = por %p74, %p75
      %p77 = scmp.ne.s32.totalorder %s69, %s72
      %p78 = scmp.eq.s32.totalorder %s17, 0
      %p79 = por %p77, %p78
      %p80 = scmp.ne.s32.totalorder %s69, %s72
      %p81 = scmp.eq.s32.totalorder %s22, 1
      %p82 = por %p80, %p81
      %p83 = scmp.ne.s32.totalorder %s72, %s73
      %p84 = scmp.eq.s32.totalorder %s22, 0
      %p85 = por %p83, %p84
      %p86 = scmp.ne.s32.totalorder %s72, %s73
      %p87 = scmp.eq.s32.totalorder %s23, 1
      %p88 = por %p86, %p87
      %p90 = scmp.ne.s32.totalorder %s73, %s89
      %p91 = scmp.eq.s32.totalorder %s23, 0
      %p92 = por %p90, %p91
      %s93 = ssub.s32 %s24, %s36
      %s94 = ssub.s32 %s25, %s32
      %s95 = sor.u32 %s93, %s94
      %p96 = scmp.eq.s32.totalorder %s95, 0
      %s98 = sadd.s32 %s97, 1
      %s99 = scalar_select %p96, %s97, %s98
      %p102 = pneg %p96
      %p103 = scmp.eq.s32.totalorder %s17, 1
      %p104 = por %p102, %p103
      %p105 = scmp.ne.s32.totalorder %s97, %s100
      %p106 = scmp.eq.s32.totalorder %s17, 0
      %p107 = por %p105, %p106
      %p108 = scmp.ne.s32.totalorder %s97, %s100
      %p109 = scmp.eq.s32.totalorder %s22, 1
      %p110 = por %p108, %p109
      %p111 = scmp.ne.s32.totalorder %s100, %s101
      %p112 = scmp.eq.s32.totalorder %s22, 0
      %p113 = por %p111, %p112
      %p114 = scmp.ne.s32.totalorder %s100, %s101
      %p115 = scmp.eq.s32.totalorder %s23, 1
      %p116 = por %p114, %p115
      %p118 = scmp.ne.s32.totalorder %s101, %s117
      %p119 = scmp.eq.s32.totalorder %s23, 0
      %p120 = por %p118, %p119
      %p121 = scmp.le.s32.totalorder 1, %s17
      %p122 = scmp.lt.s32.totalorder %s17, 3
      %p123 = pnand %p121, %p122
      %p124 = pneg %p123
      // Predicated region
      $region9: #{tpu_custom_call.1} parent=5 // pred_check
        _
      $region10: #{tpu_custom_call.1} parent=5 // pred_check_branch
        %126 = sbr.rel (%p123) target = $region12
      $region11: #{tpu_custom_call.1} parent=5 // pred_region
        %s127 = ssub.s32 %s17, 1
      $region12: #{tpu_custom_call.1} parent=5 // pred_fallthru
        _
      %p128 = scmp.lt.s32.totalorder %s17, 2
      // Predicated region
      $region13: #{tpu_custom_call.1} parent=5 // pred_check
        %p129 = pneg %p128
      $region14: #{tpu_custom_call.1} parent=5 // pred_check_branch
        %131 = sbr.rel (%p129) target = $region16
      $region15: #{tpu_custom_call.1} parent=5 // pred_region
        // Predicated region
        $region17: #{tpu_custom_call.1} parent=15 // pred_check
          %p132 = pneg %p51
        $region18: #{tpu_custom_call.1} parent=15 // pred_check_branch
          %134 = sbr.rel (%p132) target = $region20
        $region19: #{tpu_custom_call.1} parent=15 // pred_region
          %s135 = sand.u32 %s41, 1
          %s136 = scalar_lea.sflag [#allocation3], %s135
          %s137 = sand.u32 %s41, 1
          %s138 = smul.addr %s137, 64
          %s139 = scalar_lea.vmem [#allocation2], %s138
          %s140 = smul.u32 2, %s25
          %s142 = ssub.s32 1024, 1024
          %143 = vsyncadd %s136, %s142
          %s144 = smul.addr %s24, 8
          %s145 = sadd.s32 %s140, %s144
          %s146 = smul.addr %s145, 128
          %s147 = scalar_lea.hbm %s0, %s146
          %s148 = sshll.u32 %s139, 4
          %s149 = int_to_ptr.vmem [resolvable:$true] %s148
          %154 = dma.hbm_to_vmem [thread:$0]  %s147, 1024, %s149, %s136, 128, 128, 8
        $region20: #{tpu_custom_call.1} parent=15 // pred_fallthru
          _
        // Predicated region
        $region21: #{tpu_custom_call.1} parent=15 // pred_check
          %p155 = pneg %p79
        $region22: #{tpu_custom_call.1} parent=15 // pred_check_branch
          %157 = sbr.rel (%p155) target = $region24
        $region23: #{tpu_custom_call.1} parent=15 // pred_region
          %s158 = sand.u32 %s69, 1
          %s159 = scalar_lea.sflag [#allocation6], %s158
          %s160 = sand.u32 %s69, 1
          %s161 = smul.addr %s160, 16
          %s162 = scalar_lea.vmem [#allocation5], %s161
          %s163 = smul.u32 2, %s25
          %s165 = ssub.s32 256, 256
          %166 = vsyncadd %s159, %s165
          %s167 = smul.addr %s24, 2
          %s168 = sadd.s32 %s163, %s167
          %s169 = smul.addr %s168, 128
          %s170 = scalar_lea.hbm %s1, %s169
          %s171 = sshll.u32 %s162, 4
          %s172 = int_to_ptr.vmem [resolvable:$true] %s171
          %177 = dma.hbm_to_vmem [thread:$0]  %s170, 256, %s172, %s159, 128, 128, 8
        $region24: #{tpu_custom_call.1} parent=15 // pred_fallthru
          _
      $region16: #{tpu_custom_call.1} parent=5 // pred_fallthru
        _
      %p178 = scmp.le.s32.totalorder 1, %s17
      %p179 = scmp.lt.s32.totalorder %s17, 3
      %p180 = pnand %p178, %p179
      %p181 = pneg %p180
      // Predicated region
      $region25: #{tpu_custom_call.1} parent=5 // pred_check
        _
      $region26: #{tpu_custom_call.1} parent=5 // pred_check_branch
        %183 = sbr.rel (%p180) target = $region28
      $region27: #{tpu_custom_call.1} parent=5 // pred_region
        %s184 = ssub.s32 %s17, 1
        %s185 = sand.u32 %s44, 1
        %s186 = scalar_lea.sflag [#allocation3], %s185
        %s187 = sand.u32 %s44, 1
        %s188 = smul.addr %s187, 64
        %s189 = scalar_lea.vmem [#allocation2], %s188
        // Predicated region
        $region29: #{tpu_custom_call.1} parent=27 // pred_check
          %p190 = pneg %p57
        $region30: #{tpu_custom_call.1} parent=27 // pred_check_branch
          %192 = sbr.rel (%p190) target = $region32
        $region31: #{tpu_custom_call.1} parent=27 // pred_region
          %193 = dma.done %s186, 1024
        $region32: #{tpu_custom_call.1} parent=27 // pred_fallthru
          _
        %s194 = sand.u32 %s72, 1
        %s195 = scalar_lea.sflag [#allocation6], %s194
        %s196 = sand.u32 %s72, 1
        %s197 = smul.addr %s196, 16
        %s198 = scalar_lea.vmem [#allocation5], %s197
        // Predicated region
        $region33: #{tpu_custom_call.1} parent=27 // pred_check
          %p199 = pneg %p85
        $region34: #{tpu_custom_call.1} parent=27 // pred_check_branch
          %201 = sbr.rel (%p199) target = $region36
        $region35: #{tpu_custom_call.1} parent=27 // pred_region
          %202 = dma.done %s195, 256
        $region36: #{tpu_custom_call.1} parent=27 // pred_fallthru
          _
        %s203 = sand.u32 %s44, 1
        %s204 = scalar_lea.sflag [#allocation3], %s203
        %s205 = sand.u32 %s44, 1
        %s206 = smul.addr %s205, 64
        %s207 = scalar_lea.vmem [#allocation2], %s206
        %p208 = pneg %p57
        %p209 = pneg %p54
        %s210 = sand.u32 %s72, 1
        %s211 = scalar_lea.sflag [#allocation6], %s210
        %s212 = sand.u32 %s72, 1
        %s213 = smul.addr %s212, 16
        %s214 = scalar_lea.vmem [#allocation5], %s213
        %p215 = pneg %p85
        %p216 = pneg %p82
        %p217 = pneg %p113
        %p218 = pneg %p110
        %s219 = sand.u32 %s100, 1
        %s220 = scalar_lea.sflag [#allocation4], %s219
        %s221 = sand.u32 %s100, 1
        %s222 = smul.addr %s221, 64
        %s223 = scalar_lea.vmem [#allocation7], %s222
        %s224 = smul.u32 2, %s27
        %s225 = smul.u32 2, %s27
        %s226 = smul.u32 2, %s27
        %v227 = vld [vmem:[%s189] sm:$0xff]
        %v228 = vld [vmem:[%s189 + $0x8] sm:$0xff]
        %v229 = vld [vmem:[%s189 + $0x10] sm:$0xff]
        %v230 = vld [vmem:[%s189 + $0x18] sm:$0xff]
        %v231 = vld [vmem:[%s189 + $0x20] sm:$0xff]
        %v232 = vld [vmem:[%s189 + $0x28] sm:$0xff]
        %v233 = vld [vmem:[%s189 + $0x30] sm:$0xff]
        %v234 = vld [vmem:[%s189 + $0x38] sm:$0xff]
        %vm235 = vcmask 130048
        %v236 = vsel %vm235, %v227, -inf
        %237 = vmax.xlane.f32.xlu0 %v236
        %v238 = vpop.xlane.xlu0 %237
        %v239 = vsel %vm235, %v228, -inf
        %240 = vmax.xlane.f32.xlu0 %v239
        %v241 = vpop.xlane.xlu0 %240
        %v242 = vsel %vm235, %v229, -inf
        %243 = vmax.xlane.f32.xlu0 %v242
        %v244 = vpop.xlane.xlu0 %243
        %v245 = vsel %vm235, %v230, -inf
        %246 = vmax.xlane.f32.xlu0 %v245
        %v247 = vpop.xlane.xlu0 %246
        %v248 = vsel %vm235, %v231, -inf
        %249 = vmax.xlane.f32.xlu0 %v248
        %v250 = vpop.xlane.xlu0 %249
        %v251 = vsel %vm235, %v232, -inf
        %252 = vmax.xlane.f32.xlu0 %v251
        %v253 = vpop.xlane.xlu0 %252
        %v254 = vsel %vm235, %v233, -inf
        %255 = vmax.xlane.f32.xlu0 %v254
        %v256 = vpop.xlane.xlu0 %255
        %v257 = vsel %vm235, %v234, -inf
        %258 = vmax.xlane.f32.xlu0 %v257
        %v259 = vpop.xlane.xlu0 %258
        %v260 = vld [vmem:[%s198] sm:$0xff]
        %v261 = vld [vmem:[%s198 + $0x8] sm:$0xff]
        %v262 = vsub.f32 %v227, %v238
        %v263 = vsub.f32 %v228, %v241
        %v264 = vsub.f32 %v229, %v244
        %v265 = vsub.f32 %v230, %v247
        %v266 = vsub.f32 %v231, %v250
        %v267 = vsub.f32 %v232, %v253
        %v268 = vsub.f32 %v233, %v256
        %v269 = vsub.f32 %v234, %v259
        %v270 = vmul.f32 %v262, 1.442695
        %v271 = vpow.pop %v270
        %v272 = vmul.f32 %v263, 1.442695
        %v273 = vpow.pop %v272
        %v274 = vmul.f32 %v264, 1.442695
        %v275 = vpow.pop %v274
        %v276 = vmul.f32 %v265, 1.442695
        %v277 = vpow.pop %v276
        %v278 = vmul.f32 %v266, 1.442695
        %v279 = vpow.pop %v278
        %v280 = vmul.f32 %v267, 1.442695
        %v281 = vpow.pop %v280
        %v282 = vmul.f32 %v268, 1.442695
        %v283 = vpow.pop %v282
        %v284 = vmul.f32 %v269, 1.442695
        %v285 = vpow.pop %v284
        %v286 = vmul.f32 %v271, %v260
        %v287 = vmul.f32 %v273, %v261
        %v288 = vmul.f32 %v275, %v260
        %v289 = vmul.f32 %v277, %v261
        %v290 = vmul.f32 %v279, %v260
        %v291 = vmul.f32 %v281, %v261
        %v292 = vmul.f32 %v283, %v260
        %v293 = vmul.f32 %v285, %v261
        %v294 = vsel %vm235, %v286, 0.0
        %295 = vadd.xlane.f32.xlu0 %v294
        %v296 = vpop.xlane.xlu0 %295
        %v297 = vsel %vm235, %v287, 0.0
        %298 = vadd.xlane.f32.xlu0 %v297
        %v299 = vpop.xlane.xlu0 %298
        %v300 = vsel %vm235, %v288, 0.0
        %301 = vadd.xlane.f32.xlu0 %v300
        %v302 = vpop.xlane.xlu0 %301
        %v303 = vsel %vm235, %v289, 0.0
        %304 = vadd.xlane.f32.xlu0 %v303
        %v305 = vpop.xlane.xlu0 %304
        %v306 = vsel %vm235, %v290, 0.0
        %307 = vadd.xlane.f32.xlu0 %v306
        %v308 = vpop.xlane.xlu0 %307
        %v309 = vsel %vm235, %v291, 0.0
        %310 = vadd.xlane.f32.xlu0 %v309
        %v311 = vpop.xlane.xlu0 %310
        %v312 = vsel %vm235, %v292, 0.0
        %313 = vadd.xlane.f32.xlu0 %v312
        %v314 = vpop.xlane.xlu0 %313
        %v315 = vsel %vm235, %v293, 0.0
        %316 = vadd.xlane.f32.xlu0 %v315
        %v317 = vpop.xlane.xlu0 %316
        %v318 = vrcp.pop %v296
        %v319 = vrcp.pop %v299
        %v320 = vrcp.pop %v302
        %v321 = vrcp.pop %v305
        %v322 = vrcp.pop %v308
        %v323 = vrcp.pop %v311
        %v324 = vrcp.pop %v314
        %v325 = vrcp.pop %v317
        %v326 = vmul.f32 %v286, %v318
        %v327 = vmul.f32 %v287, %v319
        %v328 = vmul.f32 %v288, %v320
        %v329 = vmul.f32 %v289, %v321
        %v330 = vmul.f32 %v290, %v322
        %v331 = vmul.f32 %v291, %v323
        %v332 = vmul.f32 %v292, %v324
        %v333 = vmul.f32 %v293, %v325
        %334 = vst.msk [vmem:[%s223] sm:$0xff] %vm235, %v326
        %335 = vst.msk [vmem:[%s223 + $0x8] sm:$0xff] %vm235, %v327
        %336 = vst.msk [vmem:[%s223 + $0x10] sm:$0xff] %vm235, %v328
        %337 = vst.msk [vmem:[%s223 + $0x18] sm:$0xff] %vm235, %v329
        %338 = vst.msk [vmem:[%s223 + $0x20] sm:$0xff] %vm235, %v330
        %339 = vst.msk [vmem:[%s223 + $0x28] sm:$0xff] %vm235, %v331
        %340 = vst.msk [vmem:[%s223 + $0x30] sm:$0xff] %vm235, %v332
        %341 = vst.msk [vmem:[%s223 + $0x38] sm:$0xff] %vm235, %v333
        %s342 = sand.u32 %s100, 1
        %s343 = scalar_lea.sflag [#allocation4], %s342
        %s344 = sand.u32 %s100, 1
        %s345 = smul.addr %s344, 64
        %s346 = scalar_lea.vmem [#allocation7], %s345
        // Predicated region
        $region37: #{tpu_custom_call.1} parent=27 // pred_check
          %p347 = pneg %p110
        $region38: #{tpu_custom_call.1} parent=27 // pred_check_branch
          %349 = sbr.rel (%p347) target = $region40
        $region39: #{tpu_custom_call.1} parent=27 // pred_region
          %s350 = smul.u32 2, %s27
          %s352 = ssub.s32 1024, 1024
          %353 = vsyncadd %s343, %s352
          %s354 = smul.addr %s26, 8
          %s355 = sadd.s32 %s350, %s354
          %s356 = smul.addr %s355, 128
          %s357 = scalar_lea.hbm %s2, %s356
          %s358 = sshll.u32 %s346, 4
          %s359 = int_to_ptr.vmem [resolvable:$true] %s358
          %364 = dma.vmem_to_hbm [thread:$0]  %s359, 1024, %s357, %s343, 128, 128, 8
        $region40: #{tpu_custom_call.1} parent=27 // pred_fallthru
          _
      $region28: #{tpu_custom_call.1} parent=5 // pred_fallthru
        _
      %p365 = scmp.le.s32.totalorder 2, %s17
      // Predicated region
      $region41: #{tpu_custom_call.1} parent=5 // pred_check
        %p366 = pneg %p365
      $region42: #{tpu_custom_call.1} parent=5 // pred_check_branch
        %368 = sbr.rel (%p366) target = $region44
      $region43: #{tpu_custom_call.1} parent=5 // pred_region
        %s369 = ssub.s32 %s17, 2
        // Predicated region
        $region45: #{tpu_custom_call.1} parent=43 // pred_check
          %p370 = pneg %p116
        $region46: #{tpu_custom_call.1} parent=43 // pred_check_branch
          %372 = sbr.rel (%p370) target = $region48
        $region47: #{tpu_custom_call.1} parent=43 // pred_region
          %s373 = sand.u32 %s101, 1
          %s374 = scalar_lea.sflag [#allocation4], %s373
          %s375 = sand.u32 %s101, 1
          %s376 = smul.addr %s375, 64
          %s377 = scalar_lea.vmem [#allocation7], %s376
          %378 = dma.done %s374, 1024
        $region48: #{tpu_custom_call.1} parent=43 // pred_fallthru
          _
      $region44: #{tpu_custom_call.1} parent=5 // pred_fallthru
        _
    $region6: #{tpu_custom_call.1} parent=1 // loop_footer
      %s21 = sadd.s32 1, %s17
    $region7: #{tpu_custom_call.1} parent=1 // loop_footer_branch
      %16 = sbr.rel target = $region3
    $region8: #{tpu_custom_call.1} parent=1 // loop_exit
      _
    %379 = vsyncpa [#allocation3], 1
    %s380 = scalar_lea.sflag [#allocation3], 1
    %381 = vsyncpa %s380, 1
    %382 = vsyncpa [#allocation6], 1
    %s383 = scalar_lea.sflag [#allocation6], 1
    %384 = vsyncpa %s383, 1
    %385 = vsyncpa [#allocation4], 1
    %s386 = scalar_lea.sflag [#allocation4], 1
    %387 = vsyncpa %s386, 1

</llo_original>
